<compile_context>
chip_gen: v7x
topology: tpu7x:2x2x1
jax: 0.10.0
libtpu: 0.0.40
codegen_flags: <defaults>
</compile_context>

<pallas_src>
import functools

import jax
import jax.numpy as jnp
from jax.experimental import pallas as pl
from jax.experimental.pallas import tpu as pltpu

LANE = 128   # lane width / feature padding target
TM = 128     # adjacency row tile (output rows per grid step)


def _round_up(v, m):
    return (v + m - 1) // m * m


def _pad2(a, rows, cols):
    return jnp.pad(a, ((0, rows - a.shape[0]), (0, cols - a.shape[1])))


def _pick_tk(n_pad):
    """Contraction tile over the node axis (must divide n_pad, multiple of 128)."""
    for tk in (512, 256, 128):
        if n_pad % tk == 0:
            return tk
    return 128


def _vmem_buffer_bytes(shape, dtype):
    """Bytes of one VMEM buffer after (sublane, lane) layout padding."""
    r, c = shape
    item = jnp.dtype(dtype).itemsize
    sub = 8 * (4 // item) if item < 4 else 8        # f32 -> 8 rows, bf16 -> 16 rows
    return _round_up(r, sub) * _round_up(c, 128) * item


# ----------------------------------------------------------------------------
# Kernel: one SAGEConv layer + PReLU.
# Grid = (row tiles, contraction tiles over nodes).  acc_ref holds B @ h in f32;
# the epilogue (last k step) applies 1/deg, the fused [Wl;Wr] matmul, bias and PReLU.
# ----------------------------------------------------------------------------
def _sage_prelu_kernel(b_ref, invdeg_ref, h_agg_ref, h_self_ref, w_ref, bias_ref,
                       o_ref, acc_ref):
    k = pl.program_id(1)

    @pl.when(k == 0)
    def _():
        acc_ref[...] = jnp.zeros_like(acc_ref)

    # bf16 MXU matmul with f32 accumulation into the resident scratch.
    acc_ref[...] += jnp.dot(b_ref[...], h_agg_ref[...],
                            preferred_element_type=jnp.float32)

    @pl.when(k == pl.num_programs(1) - 1)
    def _():
        # Mean aggregation: per-row 1/deg scale on the VPU (f32).
        agg = acc_ref[...] * invdeg_ref[...]
        # Fused lin_l / lin_r: [agg | h_self] @ [Wl ; Wr]  (one MXU op, 2x contraction).
        cat = jnp.concatenate([agg.astype(jnp.bfloat16), h_self_ref[...]], axis=-1)
        out = jnp.dot(cat, w_ref[...], preferred_element_type=jnp.float32) + bias_ref[...]
        # PReLU with default slope 0.25 (fresh torch.nn.PReLU() every forward).
        o_ref[...] = jnp.where(out > 0, out, 0.25 * out).astype(o_ref.dtype)


def _sage_layer(b_pad, inv_deg, h, w_fused, bias, *, tm, tk, out_dtype):
    n_pad = b_pad.shape[0]
    f_in_pad = h.shape[1]
    f_out_pad = w_fused.shape[1]
    grid = (n_pad // tm, n_pad // tk)

    # Explicit VMEM budget: double-buffered blocks + scratch + headroom, capped at v7x.
    vmem = 2 * (_vmem_buffer_bytes((tm, tk), jnp.bfloat16)
                + _vmem_buffer_bytes((tm, 1), jnp.float32)
                + _vmem_buffer_bytes((tk, f_in_pad), jnp.bfloat16)
                + _vmem_buffer_bytes((tm, f_in_pad), jnp.bfloat16)
                + _vmem_buffer_bytes((2 * f_in_pad, f_out_pad), jnp.bfloat16)
                + _vmem_buffer_bytes((1, f_out_pad), jnp.float32)
                + _vmem_buffer_bytes((tm, f_out_pad), out_dtype)) \
        + _vmem_buffer_bytes((tm, f_in_pad), jnp.float32) + (4 << 20)
    vmem = min(int(vmem), 64 * 1024 * 1024)

    return pl.pallas_call(
        _sage_prelu_kernel,
        out_shape=jax.ShapeDtypeStruct((n_pad, f_out_pad), out_dtype),
        grid_spec=pltpu.PrefetchScalarGridSpec(
            num_scalar_prefetch=0,
            grid=grid,
            in_specs=[
                pl.BlockSpec((tm, tk), lambda i, k: (i, k)),                   # B tile
                pl.BlockSpec((tm, 1), lambda i, k: (i, 0)),                    # 1/deg rows
                pl.BlockSpec((tk, f_in_pad), lambda i, k: (k, 0)),             # h (neighbor rows)
                pl.BlockSpec((tm, f_in_pad), lambda i, k: (i, 0)),             # h (self rows)
                pl.BlockSpec((2 * f_in_pad, f_out_pad), lambda i, k: (0, 0)),  # fused [Wl; Wr]
                pl.BlockSpec((1, f_out_pad), lambda i, k: (0, 0)),             # bias
            ],
            out_specs=pl.BlockSpec((tm, f_out_pad), lambda i, k: (i, 0)),
            scratch_shapes=[pltpu.VMEM((tm, f_in_pad), jnp.float32)],
        ),
        compiler_params=pltpu.CompilerParams(
            dimension_semantics=("parallel", "arbitrary"),
            vmem_limit_bytes=vmem,
        ),
    )(b_pad, inv_deg, h, h, w_fused, bias)


# ----------------------------------------------------------------------------
# Wrapper (host-side glue: adjacency build, padding, layer selection, final slice).
# ----------------------------------------------------------------------------
def _prep_sage_params(p, f_in_pad, f_out_pad):
    """Torch-layout SAGEConv params -> fused, lane-padded, bf16 kernel operands."""
    w_l, w_r, b = p                                  # [out,in], [out,in], [out]
    wl = _pad2(w_l.T, f_in_pad, f_out_pad)           # zero-pad: padded lanes stay inert
    wr = _pad2(w_r.T, f_in_pad, f_out_pad)
    w_fused = jnp.concatenate([wl, wr], axis=0).astype(jnp.bfloat16)   # [2*Fin_pad, Fout_pad]
    bias = jnp.pad(b, (0, f_out_pad - b.shape[0])).reshape(1, f_out_pad).astype(jnp.float32)
    return w_fused, bias


def encoder_flex_fronts_forward(x, edge_index, batch_size, framework, layer, params):
    """x: [N, F_in] f32, edge_index: [2, E] int32 (row 0 = src, row 1 = dst)."""
    n, f_in = x.shape
    n_pad = _round_up(n, TM)
    tk = _pick_tk(n_pad)
    f_in_pad = _round_up(f_in, LANE)

    # --- glue: 0/1 connectivity + inverse in-degree (mean aggregation = D^{-1} B h) ---
    src, dst = edge_index[0], edge_index[1]
    b_dense = jnp.zeros((n, n), jnp.float32).at[dst, src].add(1.0)
    deg = jnp.sum(b_dense, axis=1, keepdims=True)
    inv_deg = 1.0 / jnp.maximum(deg, 1.0)

    b_pad = _pad2(b_dense, n_pad, n_pad).astype(jnp.bfloat16)   # small-int counts exact in bf16
    inv_deg_pad = _pad2(inv_deg, n_pad, 1)                      # stays f32
    h = _pad2(x, n_pad, f_in_pad).astype(jnp.bfloat16)

    # ModuleList indexing / framework flag are Python-level control flow.
    layer_params = [params["dataset_convs"][layer], params["conv2"], params["conv3"]]
    out_channels = layer_params[-1][0].shape[0]

    for li, p in enumerate(layer_params):
        f_out_pad = _round_up(p[0].shape[0], LANE)
        w_fused, bias = _prep_sage_params(p, h.shape[1], f_out_pad)
        last = li == len(layer_params) - 1
        h = _sage_layer(b_pad, inv_deg_pad, h, w_fused, bias,
                        tm=TM, tk=tk, out_dtype=jnp.float32 if last else jnp.bfloat16)

    out = h[:n, :out_channels]
    return out if framework else out[:batch_size]


# ----------------------------------------------------------------------------
# Reference + self-test
# ----------------------------------------------------------------------------
def _init_sage_params(key, in_ch, out_ch):
    """SAGEConv params in torch layout: lin_l.weight [out,in], lin_r.weight [out,in], bias [out]."""
    k1, k2, k3 = jax.random.split(key, 3)
    scale = 1.0 / jnp.sqrt(jnp.float32(in_ch))
    w_l = jax.random.normal(k1, (out_ch, in_ch), jnp.float32) * scale
    w_r = jax.random.normal(k2, (out_ch, in_ch), jnp.float32) * scale
    b_l = jax.random.normal(k3, (out_ch,), jnp.float32) * 0.1
    return (w_l, w_r, b_l)


def _reference_forward(x, edge_index, batch_size, framework, layer, params):
    """Pure-JAX f32 reference for validation."""
    n = x.shape[0]
    src, dst = edge_index[0], edge_index[1]
    a = jnp.zeros((n, n), jnp.float32).at[dst, src].add(1.0)
    deg = jnp.sum(a, axis=1, keepdims=True)
    a = a / jnp.maximum(deg, 1.0)

    def sage_prelu(h, p):
        w_l, w_r, b = p
        out = (a @ h) @ w_l.T + h @ w_r.T + b
        return jnp.where(out > 0, out, 0.25 * out)

    h = sage_prelu(x, params["dataset_convs"][layer])
    h = sage_prelu(h, params["conv2"])
    h = sage_prelu(h, params["conv3"])
    return h if framework else h[:batch_size]


def _make_params(key, f_in, hidden, out, unique_layers):
    keys = jax.random.split(key, unique_layers + 2)
    return {
        "dataset_convs": [_init_sage_params(keys[i], f_in, hidden)
                          for i in range(unique_layers)],
        "conv2": _init_sage_params(keys[unique_layers], hidden, hidden),
        "conv3": _init_sage_params(keys[unique_layers + 1], hidden, out),
    }


def _check(out, ref, expect_shape):
    assert out.shape == expect_shape, out.shape
    # bf16 activations/weights (f32 accumulation) -> slightly looser tolerance vs f32 ref
    err = float(jnp.max(jnp.abs(out - ref)))
    scale = float(jnp.max(jnp.abs(ref)))
    assert err <= 0.05 * scale + 1e-3, (err, scale)


if __name__ == "__main__":
    key = jax.random.PRNGKey(0)

    # --- test 1: small shapes consistent with the module's forward (single k tile) ---
    N, F_IN, HIDDEN, OUT, E = 16, 16, 32, 32, 40
    UNIQUE_LAYERS, batch_size, framework, layer = 2, 8, False, 1

    kx, ke1, ke2, kp, kx2, ke3, ke4 = jax.random.split(key, 7)
    x = jax.random.normal(kx, (N, F_IN), jnp.float32)
    src = jax.random.randint(ke1, (E,), 0, N, jnp.int32)
    dst = jax.random.randint(ke2, (E,), 0, N, jnp.int32)
    edge_index = jnp.stack([src, dst], axis=0)
    params = _make_params(kp, F_IN, HIDDEN, OUT, UNIQUE_LAYERS)

    out = jax.block_until_ready(
        encoder_flex_fronts_forward(x, edge_index, batch_size, framework, layer, params))
    ref = _reference_forward(x, edge_index, batch_size, framework, layer, params)
    _check(out, ref, (batch_size, OUT))

    # --- test 2: larger graph to exercise multi-tile contraction + framework=True ---
    N2, E2 = 300, 1200
    x2 = jax.random.normal(kx2, (N2, F_IN), jnp.float32)
    src2 = jax.random.randint(ke3, (E2,), 0, N2, jnp.int32)
    dst2 = jax.random.randint(ke4, (E2,), 0, N2, jnp.int32)
    edge_index2 = jnp.stack([src2, dst2], axis=0)

    out2 = jax.block_until_ready(
        encoder_flex_fronts_forward(x2, edge_index2, 4, True, 0, params))
    ref2 = _reference_forward(x2, edge_index2, 4, True, 0, params)
    _check(out2, ref2, (N2, OUT))

    print("KERNEL_OK")
</pallas_src>

<mosaic_0001>
module attributes {stable_mosaic.version = 11 : i64} {
  func.func @_sage_prelu_kernel(%arg0: i32, %arg1: i32, %arg2: memref<128x128xbf16, #tpu.memory_space<vmem>>, %arg3: memref<128x1xf32, #tpu.memory_space<vmem>>, %arg4: memref<128x128xbf16, #tpu.memory_space<vmem>>, %arg5: memref<128x128xbf16, #tpu.memory_space<vmem>>, %arg6: memref<256x128xbf16, #tpu.memory_space<vmem>>, %arg7: memref<1x128xf32, #tpu.memory_space<vmem>>, %arg8: memref<128x128xbf16, #tpu.memory_space<vmem>>, %arg9: memref<128x128xf32, #tpu.memory_space<vmem>>) attributes {dimension_semantics = [#tpu.dimension_semantics<parallel>, #tpu.dimension_semantics<arbitrary>], iteration_bounds = array<i64: 1, 1>, scalar_prefetch = 0 : i64, scratch_operands = 1 : i64, tpu.core_type = #tpu.core_type<tc>, window_params = [{transform_indices = @transform_0, window_bounds = array<i64: 128, 128>}, {transform_indices = @transform_1, window_bounds = array<i64: 128, 1>}, {transform_indices = @transform_2, window_bounds = array<i64: 128, 128>}, {transform_indices = @transform_3, window_bounds = array<i64: 128, 128>}, {pipeline_mode = #tpu.pipeline_mode<synchronous>, transform_indices = @transform_4, window_bounds = array<i64: 256, 128>}, {pipeline_mode = #tpu.pipeline_mode<synchronous>, transform_indices = @transform_5, window_bounds = array<i64: 1, 128>}, {transform_indices = @transform_6, window_bounds = array<i64: 128, 128>}]} {
    %c0_i32 = arith.constant 0 : i32
    %0 = arith.cmpi eq, %arg1, %c0_i32 : i32
    %1 = arith.extui %0 : i1 to i32
    %c0_i32_0 = arith.constant 0 : i32
    %2 = arith.cmpi ne, %1, %c0_i32_0 : i32
    scf.if %2 {
      %cst_10 = arith.constant 0.000000e+00 : f32
      %12 = vector.broadcast %cst_10 : f32 to vector<128x128xf32>
      %c0_11 = arith.constant 0 : index
      %c0_12 = arith.constant 0 : index
      %13 = vector.load %arg9[%c0_11, %c0_12] : memref<128x128xf32, #tpu.memory_space<vmem>>, vector<128x128xf32>
      tpu.vector_store %arg9[%c0_11, %c0_12], %12 {strides = array<i32>} : memref<128x128xf32, #tpu.memory_space<vmem>>, vector<128x128xf32>,
    } else {
    }
    %c0 = arith.constant 0 : index
    %c0_1 = arith.constant 0 : index
    %3 = vector.load %arg9[%c0, %c0_1] : memref<128x128xf32, #tpu.memory_space<vmem>>, vector<128x128xf32>
    %c0_2 = arith.constant 0 : index
    %c0_3 = arith.constant 0 : index
    %4 = vector.load %arg2[%c0_2, %c0_3] : memref<128x128xbf16, #tpu.memory_space<vmem>>, vector<128x128xbf16>
    %c0_4 = arith.constant 0 : index
    %c0_5 = arith.constant 0 : index
    %5 = vector.load %arg4[%c0_4, %c0_5] : memref<128x128xbf16, #tpu.memory_space<vmem>>, vector<128x128xbf16>
    %cst = arith.constant dense<0.000000e+00> : vector<128x128xf32>
    %6 = tpu.matmul %4, %5, %cst {dimension_numbers = #tpu.dot_dimension_numbers<[1], [0], [0], [1], [0, 0, 1, 1], [], []>} : vector<128x128xbf16>, vector<128x128xbf16>, vector<128x128xf32> -> vector<128x128xf32>
    %7 = arith.addf %3, %6 : vector<128x128xf32>
    %c0_6 = arith.constant 0 : index
    %c0_7 = arith.constant 0 : index
    %8 = vector.load %arg9[%c0_6, %c0_7] : memref<128x128xf32, #tpu.memory_space<vmem>>, vector<128x128xf32>
    tpu.vector_store %arg9[%c0_6, %c0_7], %7 {strides = array<i32>} : memref<128x128xf32, #tpu.memory_space<vmem>>, vector<128x128xf32>,
    %c0_i32_8 = arith.constant 0 : i32
    %9 = arith.cmpi eq, %arg1, %c0_i32_8 : i32
    %10 = arith.extui %9 : i1 to i32
    %c0_i32_9 = arith.constant 0 : i32
    %11 = arith.cmpi ne, %10, %c0_i32_9 : i32
    scf.if %11 {
      %c0_10 = arith.constant 0 : index
      %c0_11 = arith.constant 0 : index
      %12 = vector.load %arg9[%c0_10, %c0_11] : memref<128x128xf32, #tpu.memory_space<vmem>>, vector<128x128xf32>
      %c0_12 = arith.constant 0 : index
      %c0_13 = arith.constant 0 : index
      %13 = vector.load %arg3[%c0_12, %c0_13] : memref<128x1xf32, #tpu.memory_space<vmem>>, vector<128x1xf32>
      %14 = vector.broadcast %13 : vector<128x1xf32> to vector<128x128xf32>
      %15 = arith.mulf %12, %14 : vector<128x128xf32>
      %16 = arith.truncf %15 : vector<128x128xf32> to vector<128x128xbf16>
      %c0_14 = arith.constant 0 : index
      %c0_15 = arith.constant 0 : index
      %17 = vector.load %arg5[%c0_14, %c0_15] : memref<128x128xbf16, #tpu.memory_space<vmem>>, vector<128x128xbf16>
      %18 = tpu.concatenate %16, %17 in 1 : vector<128x128xbf16>, vector<128x128xbf16> -> vector<128x256xbf16>
      %c0_16 = arith.constant 0 : index
      %c0_17 = arith.constant 0 : index
      %19 = vector.load %arg6[%c0_16, %c0_17] : memref<256x128xbf16, #tpu.memory_space<vmem>>, vector<256x128xbf16>
      %cst_18 = arith.constant dense<0.000000e+00> : vector<128x128xf32>
      %20 = tpu.matmul %18, %19, %cst_18 {dimension_numbers = #tpu.dot_dimension_numbers<[1], [0], [0], [1], [0, 0, 1, 1], [], []>} : vector<128x256xbf16>, vector<256x128xbf16>, vector<128x128xf32> -> vector<128x128xf32>
      %c0_19 = arith.constant 0 : index
      %c0_20 = arith.constant 0 : index
      %21 = vector.load %arg7[%c0_19, %c0_20] : memref<1x128xf32, #tpu.memory_space<vmem>>, vector<1x128xf32>
      %22 = vector.broadcast %21 : vector<1x128xf32> to vector<128x128xf32>
      %23 = arith.addf %20, %22 : vector<128x128xf32>
      %cst_21 = arith.constant 0.000000e+00 : f32
      %24 = vector.broadcast %cst_21 : f32 to vector<128x128xf32>
      %25 = arith.cmpf ogt, %23, %24 : vector<128x128xf32>
      %cst_22 = arith.constant 2.500000e-01 : f32
      %26 = vector.broadcast %cst_22 : f32 to vector<128x128xf32>
      %27 = arith.mulf %26, %23 : vector<128x128xf32>
      %28 = arith.select %25, %23, %27 : vector<128x128xi1>, vector<128x128xf32>
      %29 = arith.truncf %28 : vector<128x128xf32> to vector<128x128xbf16>
      %c0_23 = arith.constant 0 : index
      %c0_24 = arith.constant 0 : index
      %30 = vector.load %arg8[%c0_23, %c0_24] : memref<128x128xbf16, #tpu.memory_space<vmem>>, vector<128x128xbf16>
      tpu.vector_store %arg8[%c0_23, %c0_24], %29 {strides = array<i32>} : memref<128x128xbf16, #tpu.memory_space<vmem>>, vector<128x128xbf16>,
    } else {
    }
    return
  }
  func.func @transform_0(%arg0: i32, %arg1: i32) -> (i32, i32) {
    %c0_i32 = arith.constant 0 : i32
    return %arg0, %arg1 : i32, i32
  }
  func.func @transform_1(%arg0: i32, %arg1: i32) -> (i32, i32) {
    %c0_i32 = arith.constant 0 : i32
    %c0_i32_0 = arith.constant 0 : i32
    return %arg0, %c0_i32 : i32, i32
  }
  func.func @transform_2(%arg0: i32, %arg1: i32) -> (i32, i32) {
    %c0_i32 = arith.constant 0 : i32
    %c0_i32_0 = arith.constant 0 : i32
    return %arg1, %c0_i32 : i32, i32
  }
  func.func @transform_3(%arg0: i32, %arg1: i32) -> (i32, i32) {
    %c0_i32 = arith.constant 0 : i32
    %c0_i32_0 = arith.constant 0 : i32
    return %arg0, %c0_i32 : i32, i32
  }
  func.func @transform_4(%arg0: i32, %arg1: i32) -> (i32, i32) {
    %c0_i32 = arith.constant 0 : i32
    %c0_i32_0 = arith.constant 0 : i32
    %c0_i32_1 = arith.constant 0 : i32
    return %c0_i32, %c0_i32_0 : i32, i32
  }
  func.func @transform_5(%arg0: i32, %arg1: i32) -> (i32, i32) {
    %c0_i32 = arith.constant 0 : i32
    %c0_i32_0 = arith.constant 0 : i32
    %c0_i32_1 = arith.constant 0 : i32
    return %c0_i32, %c0_i32_0 : i32, i32
  }
  func.func @transform_6(%arg0: i32, %arg1: i32) -> (i32, i32) {
    %c0_i32 = arith.constant 0 : i32
    %c0_i32_0 = arith.constant 0 : i32
    return %arg0, %c0_i32 : i32, i32
  }
}

</mosaic_0001>

<llo_original>
// kernel: tpu_custom_call.1
$region0: #{tpu_custom_call.1}
  #allocation0 [shape = 'u32[]', space=smem, size = 0x4, offset = 0x4, fixed_abs, tag = 'smem constant byte address 0x4 - core index']
  #allocation1 [shape = 'u32[144,128]{1,0:T(1,128)}', space=vmem, size = 0x12000, scoped, tag = 'internal scratch']
  #allocation2 [shape = 'f32[128,128]{1,0:T(8,128)}', space=vmem, size = 0x10000, scoped, tag = 'scratch operand']
  %s0 = inlined_call_operand.hbm [shape: bf16[128,128], index: 0, kind: input, shape index: {}]
  %s1 = inlined_call_operand.vmem [shape: f32[128,1], index: 1, kind: input, shape index: {}]
  %s2 = inlined_call_operand.hbm [shape: bf16[128,128], index: 2, kind: input, shape index: {}]
  %s3 = inlined_call_operand.hbm [shape: bf16[128,128], index: 3, kind: input, shape index: {}]
  %s4 = inlined_call_operand.vmem [shape: bf16[256,128], index: 4, kind: input, shape index: {}]
  %s5 = inlined_call_operand.vmem [shape: f32[1,128], index: 5, kind: input, shape index: {}]
  %s6 = inlined_call_operand.hbm [shape: bf16[128,128], index: 6, kind: output, shape index: {}]
  %s7 = sld [smem:[#allocation0]]
  $region54: #{tpu_custom_call.1} parent=0
    _
  %s9 = ssub.s32 1, %s7
  %s10 = scalar_select 0, %s9, %s7
  $region1: #{tpu_custom_call.1} parent=0
    #allocation3 [shape = 'u8[32768]{0}', space=vmem, size = 0x8000, scoped, tag = 'input window, operand 0, single buffered']
    #allocation4 [shape = 's32[1]{0}', space=sflag, size = 0x4, scoped, tag = 'scoped memory for tpu_custom_call.1']
    #allocation5 [shape = 's32[1]{0}', space=sflag, size = 0x4, scoped, tag = 'scoped memory for tpu_custom_call.1']
    #allocation6 [shape = 'u8[32768]{0}', space=vmem, size = 0x8000, scoped, tag = 'input window, operand 2, single buffered']
    #allocation7 [shape = 's32[1]{0}', space=sflag, size = 0x4, scoped, tag = 'scoped memory for tpu_custom_call.1']
    #allocation8 [shape = 'u8[32768]{0}', space=vmem, size = 0x8000, scoped, tag = 'input window, operand 3, single buffered']
    #allocation9 [shape = 'u8[32768]{0}', space=vmem, size = 0x8000, scoped, tag = 'output window, operand 0, single buffered']
    %11 = vsyncpa [#allocation4], 0
    %12 = vsyncpa [#allocation7], 0
    %13 = vsyncpa [#allocation5], 0
    // Predicated region
    $region2: #{tpu_custom_call.1} parent=1 // pred_check
      _
    $region3: #{tpu_custom_call.1} parent=1 // pred_check_branch
      %15 = sbr.rel (0) target = $region5
    $region4: #{tpu_custom_call.1} parent=1 // pred_region
      %s17 = ssub.s32 1024, 1024
      %18 = vsyncadd [#allocation4], %s17
      %s19 = sshll.u32 [#allocation3], 4
      %s20 = int_to_ptr.vmem [resolvable:$true] %s19
      %25 = dma.hbm_to_vmem [thread:$0]  %s0, 1024, %s20, [#allocation4], 64, 64, 4
    $region5: #{tpu_custom_call.1} parent=1 // pred_fallthru
      _
    // Predicated region
    $region6: #{tpu_custom_call.1} parent=1 // pred_check
      _
    $region7: #{tpu_custom_call.1} parent=1 // pred_check_branch
      %27 = sbr.rel (0) target = $region9
    $region8: #{tpu_custom_call.1} parent=1 // pred_region
      _
    $region9: #{tpu_custom_call.1} parent=1 // pred_fallthru
      _
    // Predicated region
    $region10: #{tpu_custom_call.1} parent=1 // pred_check
      _
    $region11: #{tpu_custom_call.1} parent=1 // pred_check_branch
      %29 = sbr.rel (0) target = $region13
    $region12: #{tpu_custom_call.1} parent=1 // pred_region
      %s31 = ssub.s32 1024, 1024
      %32 = vsyncadd [#allocation7], %s31
      %s33 = sshll.u32 [#allocation6], 4
      %s34 = int_to_ptr.vmem [resolvable:$true] %s33
      %39 = dma.hbm_to_vmem [thread:$0]  %s2, 1024, %s34, [#allocation7], 64, 64, 4
    $region13: #{tpu_custom_call.1} parent=1 // pred_fallthru
      _
    // Predicated region
    $region14: #{tpu_custom_call.1} parent=1 // pred_check
      _
    $region15: #{tpu_custom_call.1} parent=1 // pred_check_branch
      %41 = sbr.rel (0) target = $region17
    $region16: #{tpu_custom_call.1} parent=1 // pred_region
      %s43 = ssub.s32 1024, 1024
      %44 = vsyncadd [#allocation7], %s43
      %s45 = sshll.u32 [#allocation8], 4
      %s46 = int_to_ptr.vmem [resolvable:$true] %s45
      %51 = dma.hbm_to_vmem [thread:$0]  %s3, 1024, %s46, [#allocation7], 64, 64, 4
    $region17: #{tpu_custom_call.1} parent=1 // pred_fallthru
      _
    // Predicated region
    $region18: #{tpu_custom_call.1} parent=1 // pred_check
      _
    $region19: #{tpu_custom_call.1} parent=1 // pred_check_branch
      %53 = sbr.rel (0) target = $region21
    $region20: #{tpu_custom_call.1} parent=1 // pred_region
      _
    $region21: #{tpu_custom_call.1} parent=1 // pred_fallthru
      _
    // Predicated region
    $region22: #{tpu_custom_call.1} parent=1 // pred_check
      _
    $region23: #{tpu_custom_call.1} parent=1 // pred_check_branch
      %55 = sbr.rel (0) target = $region25
    $region24: #{tpu_custom_call.1} parent=1 // pred_region
      _
    $region25: #{tpu_custom_call.1} parent=1 // pred_fallthru
      _
    // Predicated region
    $region26: #{tpu_custom_call.1} parent=1 // pred_check
      _
    $region27: #{tpu_custom_call.1} parent=1 // pred_check_branch
      %57 = sbr.rel (0) target = $region29
    $region28: #{tpu_custom_call.1} parent=1 // pred_region
      %58 = dma.done [#allocation4], 1024
    $region29: #{tpu_custom_call.1} parent=1 // pred_fallthru
      _
    // Predicated region
    $region30: #{tpu_custom_call.1} parent=1 // pred_check
      _
    $region31: #{tpu_custom_call.1} parent=1 // pred_check_branch
      %60 = sbr.rel (0) target = $region33
    $region32: #{tpu_custom_call.1} parent=1 // pred_region
      %61 = dma.done [#allocation7], 1024
    $region33: #{tpu_custom_call.1} parent=1 // pred_fallthru
      _
    // Predicated region
    $region34: #{tpu_custom_call.1} parent=1 // pred_check
      _
    $region35: #{tpu_custom_call.1} parent=1 // pred_check_branch
      %63 = sbr.rel (0) target = $region37
    $region36: #{tpu_custom_call.1} parent=1 // pred_region
      %64 = dma.done [#allocation7], 1024
    $region37: #{tpu_custom_call.1} parent=1 // pred_fallthru
      _
    %p66 = scmp.eq.s32.totalorder 0, 0
    // Predicated region
    $region38: #{tpu_custom_call.1} parent=1 // pred_check
      %p67 = pneg %p66
    $region39: #{tpu_custom_call.1} parent=1 // pred_check_branch
      %69 = sbr.rel (%p67) target = $region41
    $region40: #{tpu_custom_call.1} parent=1 // pred_region
      %70 = vst [vmem:[#allocation2] sm:$0xff] 0.0
      %71 = vst [vmem:[#allocation2 + $0x8] sm:$0xff] 0.0
      %72 = vst [vmem:[#allocation2 + $0x10] sm:$0xff] 0.0
      %73 = vst [vmem:[#allocation2 + $0x18] sm:$0xff] 0.0
      %74 = vst [vmem:[#allocation2 + $0x20] sm:$0xff] 0.0
      %75 = vst [vmem:[#allocation2 + $0x28] sm:$0xff] 0.0
      %76 = vst [vmem:[#allocation2 + $0x30] sm:$0xff] 0.0
      %77 = vst [vmem:[#allocation2 + $0x38] sm:$0xff] 0.0
      %78 = vst [vmem:[#allocation2 + $0x40] sm:$0xff] 0.0
      %79 = vst [vmem:[#allocation2 + $0x48] sm:$0xff] 0.0
      %80 = vst [vmem:[#allocation2 + $0x50] sm:$0xff] 0.0
      %81 = vst [vmem:[#allocation2 + $0x58] sm:$0xff] 0.0
      %82 = vst [vmem:[#allocation2 + $0x60] sm:$0xff] 0.0
      %83 = vst [vmem:[#allocation2 + $0x68] sm:$0xff] 0.0
      %84 = vst [vmem:[#allocation2 + $0x70] sm:$0xff] 0.0
      %85 = vst [vmem:[#allocation2 + $0x78] sm:$0xff] 0.0
    $region41: #{tpu_custom_call.1} parent=1 // pred_fallthru
      _
    %v86 = vld [vmem:[#allocation2] sm:$0xff]
    %v87 = vld [vmem:[#allocation2 + $0x8] sm:$0xff]
    %v88 = vld [vmem:[#allocation2 + $0x10] sm:$0xff]
    %v89 = vld [vmem:[#allocation2 + $0x18] sm:$0xff]
    %v90 = vld [vmem:[#allocation2 + $0x20] sm:$0xff]
    %v91 = vld [vmem:[#allocation2 + $0x28] sm:$0xff]
    %v92 = vld [vmem:[#allocation2 + $0x30] sm:$0xff]
    %v93 = vld [vmem:[#allocation2 + $0x38] sm:$0xff]
    %v94 = vld [vmem:[#allocation2 + $0x40] sm:$0xff]
    %v95 = vld [vmem:[#allocation2 + $0x48] sm:$0xff]
    %v96 = vld [vmem:[#allocation2 + $0x50] sm:$0xff]
    %v97 = vld [vmem:[#allocation2 + $0x58] sm:$0xff]
    %v98 = vld [vmem:[#allocation2 + $0x60] sm:$0xff]
    %v99 = vld [vmem:[#allocation2 + $0x68] sm:$0xff]
    %v100 = vld [vmem:[#allocation2 + $0x70] sm:$0xff]
    %v101 = vld [vmem:[#allocation2 + $0x78] sm:$0xff]
    %v102 = vld [vmem:[#allocation3] sm:$0xf]
    %v103 = vld [vmem:[#allocation3 + $0x4] sm:$0xf]
    %v104 = vld [vmem:[#allocation3 + $0x8] sm:$0xf]
    %v105 = vld [vmem:[#allocation3 + $0xc] sm:$0xf]
    %v106 = vld [vmem:[#allocation3 + $0x10] sm:$0xf]
    %v107 = vld [vmem:[#allocation3 + $0x14] sm:$0xf]
    %v108 = vld [vmem:[#allocation3 + $0x18] sm:$0xf]
    %v109 = vld [vmem:[#allocation3 + $0x1c] sm:$0xf]
    %v110 = vld [vmem:[#allocation3 + $0x20] sm:$0xf]
    %v111 = vld [vmem:[#allocation3 + $0x24] sm:$0xf]
    %v112 = vld [vmem:[#allocation3 + $0x28] sm:$0xf]
    %v113 = vld [vmem:[#allocation3 + $0x2c] sm:$0xf]
    %v114 = vld [vmem:[#allocation3 + $0x30] sm:$0xf]
    %v115 = vld [vmem:[#allocation3 + $0x34] sm:$0xf]
    %v116 = vld [vmem:[#allocation3 + $0x38] sm:$0xf]
    %v117 = vld [vmem:[#allocation3 + $0x3c] sm:$0xf]
    %v118 = vld [vmem:[#allocation6] sm:$0xf]
    %v119 = vld [vmem:[#allocation6 + $0x4] sm:$0xf]
    %v120 = vld [vmem:[#allocation6 + $0x8] sm:$0xf]
    %v121 = vld [vmem:[#allocation6 + $0xc] sm:$0xf]
    %v122 = vld [vmem:[#allocation6 + $0x10] sm:$0xf]
    %v123 = vld [vmem:[#allocation6 + $0x14] sm:$0xf]
    %v124 = vld [vmem:[#allocation6 + $0x18] sm:$0xf]
    %v125 = vld [vmem:[#allocation6 + $0x1c] sm:$0xf]
    %v126 = vld [vmem:[#allocation6 + $0x20] sm:$0xf]
    %v127 = vld [vmem:[#allocation6 + $0x24] sm:$0xf]
    %v128 = vld [vmem:[#allocation6 + $0x28] sm:$0xf]
    %v129 = vld [vmem:[#allocation6 + $0x2c] sm:$0xf]
    %v130 = vld [vmem:[#allocation6 + $0x30] sm:$0xf]
    %v131 = vld [vmem:[#allocation6 + $0x34] sm:$0xf]
    %v132 = vld [vmem:[#allocation6 + $0x38] sm:$0xf]
    %v133 = vld [vmem:[#allocation6 + $0x3c] sm:$0xf]
    %v150 = vunpack.c.l.b16 %v102
    %v151 = vunpack.c.l.b16 %v103
    %v152 = vunpack.c.l.b16 %v104
    %v153 = vunpack.c.l.b16 %v105
    %v154 = vunpack.c.l.b16 %v106
    %v155 = vunpack.c.l.b16 %v107
    %v156 = vunpack.c.l.b16 %v108
    %v157 = vunpack.c.l.b16 %v109
    %v158 = vunpack.c.l.b16 %v110
    %v159 = vunpack.c.l.b16 %v111
    %v160 = vunpack.c.l.b16 %v112
    %v161 = vunpack.c.l.b16 %v113
    %v162 = vunpack.c.l.b16 %v114
    %v163 = vunpack.c.l.b16 %v115
    %v164 = vunpack.c.l.b16 %v116
    %v165 = vunpack.c.l.b16 %v117
    %v166 = vpack.c.b16 %v151, %v150
    %v167 = vpack.c.b16 %v153, %v152
    %v168 = vpack.c.b16 %v155, %v154
    %v169 = vpack.c.b16 %v157, %v156
    %v170 = vpack.c.b16 %v159, %v158
    %v171 = vpack.c.b16 %v161, %v160
    %v172 = vpack.c.b16 %v163, %v162
    %v173 = vpack.c.b16 %v165, %v164
    %v198 = vunpack.c.l.b16 %v118
    %v199 = vunpack.c.l.b16 %v119
    %v200 = vunpack.c.l.b16 %v120
    %v201 = vunpack.c.l.b16 %v121
    %v202 = vunpack.c.l.b16 %v122
    %v203 = vunpack.c.l.b16 %v123
    %v204 = vunpack.c.l.b16 %v124
    %v205 = vunpack.c.l.b16 %v125
    %v206 = vunpack.c.l.b16 %v126
    %v207 = vunpack.c.l.b16 %v127
    %v208 = vunpack.c.l.b16 %v128
    %v209 = vunpack.c.l.b16 %v129
    %v210 = vunpack.c.l.b16 %v130
    %v211 = vunpack.c.l.b16 %v131
    %v212 = vunpack.c.l.b16 %v132
    %v213 = vunpack.c.l.b16 %v133
    %v214 = vpack.c.b16 %v199, %v198
    %v215 = vpack.c.b16 %v201, %v200
    %v216 = vpack.c.b16 %v203, %v202
    %v217 = vpack.c.b16 %v205, %v204
    %v218 = vpack.c.b16 %v207, %v206
    %v219 = vpack.c.b16 %v209, %v208
    %v220 = vpack.c.b16 %v211, %v210
    %v221 = vpack.c.b16 %v213, %v212
    %230 = vmatprep.subr.bf16.mxu0 0
    %231 = vmatpush1.bf16.msra.mxu0 %v214
    %232 = vmatprep.subr.bf16.mxu0 0
    %233 = vmatpush1.bf16.msra.mxu0 %v215
    %234 = vmatprep.subr.bf16.mxu0 0
    %235 = vmatpush1.bf16.msra.mxu0 %v216
    %236 = vmatprep.subr.bf16.mxu0 0
    %237 = vmatpush1.bf16.msra.mxu0 %v217
    %238 = vmatprep.subr.bf16.mxu0 0
    %239 = vmatpush1.bf16.msra.mxu0 %v218
    %240 = vmatprep.subr.bf16.mxu0 0
    %241 = vmatpush1.bf16.msra.mxu0 %v219
    %242 = vmatprep.subr.bf16.mxu0 0
    %243 = vmatpush1.bf16.msra.mxu0 %v220
    %244 = vmatprep.subr.bf16.mxu0 0
    %245 = vmatpush1.bf16.msra.mxu0 %v221
    %246 = vmatprep.subr.bf16.mxu0 0
    %247 = vmatpush1.bf16.msra.mxu0 0
    %248 = vmatprep.subr.bf16.mxu0 0
    %249 = vmatpush1.bf16.msra.mxu0 0
    %250 = vmatprep.subr.bf16.mxu0 0
    %251 = vmatpush1.bf16.msra.mxu0 0
    %252 = vmatprep.subr.bf16.mxu0 0
    %253 = vmatpush1.bf16.msra.mxu0 0
    %254 = vmatprep.subr.bf16.mxu0 0
    %255 = vmatpush1.bf16.msra.mxu0 0
    %256 = vmatprep.subr.bf16.mxu0 0
    %257 = vmatpush1.bf16.msra.mxu0 0
    %258 = vmatprep.subr.bf16.mxu0 0
    %259 = vmatpush1.bf16.msra.mxu0 0
    %260 = vmatprep.subr.bf16.mxu0 0
    %261 = vmatpush1.bf16.msra.mxu0 0
    %262 = vmatprep.mubr.bf16.mxu0 0
    %263 = vmatmul.mubr.bf16.gmra.mrb[0].mxu0 %v166
    %v264 = vpop.f32.mrb[0].mxu0
    %v265 = vadd.f32 0.0, %v264
    %v266 = vpop.f32.mrb[0].mxu0
    %v267 = vpop.f32.mrb[0].mxu0
    %v268 = vadd.f32 0.0, %v267
    %v269 = vpop.f32.mrb[0].mxu0
    %270 = vmatprep.mubr.bf16.mxu0 0
    %271 = vmatmul.mubr.bf16.gmra.mrb[0].mxu0 %v167
    %v272 = vpop.f32.mrb[0].mxu0
    %v273 = vadd.f32 0.0, %v272
    %v274 = vpop.f32.mrb[0].mxu0
    %v275 = vpop.f32.mrb[0].mxu0
    %v276 = vadd.f32 0.0, %v275
    %v277 = vpop.f32.mrb[0].mxu0
    %278 = vmatprep.mubr.bf16.mxu0 0
    %279 = vmatmul.mubr.bf16.gmra.mrb[0].mxu0 %v168
    %v280 = vpop.f32.mrb[0].mxu0
    %v281 = vadd.f32 0.0, %v280
    %v282 = vpop.f32.mrb[0].mxu0
    %v283 = vpop.f32.mrb[0].mxu0
    %v284 = vadd.f32 0.0, %v283
    %v285 = vpop.f32.mrb[0].mxu0
    %286 = vmatprep.mubr.bf16.mxu0 0
    %287 = vmatmul.mubr.bf16.gmra.mrb[0].mxu0 %v169
    %v288 = vpop.f32.mrb[0].mxu0
    %v289 = vadd.f32 0.0, %v288
    %v290 = vpop.f32.mrb[0].mxu0
    %v291 = vpop.f32.mrb[0].mxu0
    %v292 = vadd.f32 0.0, %v291
    %v293 = vpop.f32.mrb[0].mxu0
    %294 = vmatprep.mubr.bf16.mxu0 0
    %295 = vmatmul.mubr.bf16.gmra.mrb[0].mxu0 %v170
    %v296 = vpop.f32.mrb[0].mxu0
    %v297 = vadd.f32 0.0, %v296
    %v298 = vpop.f32.mrb[0].mxu0
    %v299 = vpop.f32.mrb[0].mxu0
    %v300 = vadd.f32 0.0, %v299
    %v301 = vpop.f32.mrb[0].mxu0
    %302 = vmatprep.mubr.bf16.mxu0 0
    %303 = vmatmul.mubr.bf16.gmra.mrb[0].mxu0 %v171
    %v304 = vpop.f32.mrb[0].mxu0
    %v305 = vadd.f32 0.0, %v304
    %v306 = vpop.f32.mrb[0].mxu0
    %v307 = vpop.f32.mrb[0].mxu0
    %v308 = vadd.f32 0.0, %v307
    %v309 = vpop.f32.mrb[0].mxu0
    %310 = vmatprep.mubr.bf16.mxu0 0
    %311 = vmatmul.mubr.bf16.gmra.mrb[0].mxu0 %v172
    %v312 = vpop.f32.mrb[0].mxu0
    %v313 = vadd.f32 0.0, %v312
    %v314 = vpop.f32.mrb[0].mxu0
    %v315 = vpop.f32.mrb[0].mxu0
    %v316 = vadd.f32 0.0, %v315
    %v317 = vpop.f32.mrb[0].mxu0
    %318 = vmatprep.mubr.bf16.mxu0 0
    %319 = vmatmul.mubr.bf16.gmra.mrb[0].mxu0 %v173
    %v320 = vpop.f32.mrb[0].mxu0
    %v321 = vadd.f32 0.0, %v320
    %v322 = vpop.f32.mrb[0].mxu0
    %v323 = vpop.f32.mrb[0].mxu0
    %v324 = vadd.f32 0.0, %v323
    %v325 = vpop.f32.mrb[0].mxu0
    %326 = vdwg.mxu0
    %v327 = vadd.f32 %v86, %v265
    %v328 = vadd.f32 %v87, %v268
    %v329 = vadd.f32 %v88, %v273
    %v330 = vadd.f32 %v89, %v276
    %v331 = vadd.f32 %v90, %v281
    %v332 = vadd.f32 %v91, %v284
    %v333 = vadd.f32 %v92, %v289
    %v334 = vadd.f32 %v93, %v292
    %v335 = vadd.f32 %v94, %v297
    %v336 = vadd.f32 %v95, %v300
    %v337 = vadd.f32 %v96, %v305
    %v338 = vadd.f32 %v97, %v308
    %v339 = vadd.f32 %v98, %v313
    %v340 = vadd.f32 %v99, %v316
    %v341 = vadd.f32 %v100, %v321
    %v342 = vadd.f32 %v101, %v324
    %343 = vst [vmem:[#allocation2] sm:$0xff] %v327
    %344 = vst [vmem:[#allocation2 + $0x8] sm:$0xff] %v328
    %345 = vst [vmem:[#allocation2 + $0x10] sm:$0xff] %v329
    %346 = vst [vmem:[#allocation2 + $0x18] sm:$0xff] %v330
    %347 = vst [vmem:[#allocation2 + $0x20] sm:$0xff] %v331
    %348 = vst [vmem:[#allocation2 + $0x28] sm:$0xff] %v332
    %349 = vst [vmem:[#allocation2 + $0x30] sm:$0xff] %v333
    %350 = vst [vmem:[#allocation2 + $0x38] sm:$0xff] %v334
    %351 = vst [vmem:[#allocation2 + $0x40] sm:$0xff] %v335
    %352 = vst [vmem:[#allocation2 + $0x48] sm:$0xff] %v336
    %353 = vst [vmem:[#allocation2 + $0x50] sm:$0xff] %v337
    %354 = vst [vmem:[#allocation2 + $0x58] sm:$0xff] %v338
    %355 = vst [vmem:[#allocation2 + $0x60] sm:$0xff] %v339
    %356 = vst [vmem:[#allocation2 + $0x68] sm:$0xff] %v340
    %357 = vst [vmem:[#allocation2 + $0x70] sm:$0xff] %v341
    %358 = vst [vmem:[#allocation2 + $0x78] sm:$0xff] %v342
    // Predicated region
    $region42: #{tpu_custom_call.1} parent=1 // pred_check
      %p359 = pneg %p66
    $region43: #{tpu_custom_call.1} parent=1 // pred_check_branch
      %361 = sbr.rel (%p359) target = $region45
    $region44: #{tpu_custom_call.1} parent=1 // pred_region
      %v362 = vld [vmem:[#allocation2] sm:$0xff]
      %v363 = vld [vmem:[#allocation2 + $0x8] sm:$0xff]
      %v364 = vld [vmem:[#allocation2 + $0x10] sm:$0xff]
      %v365 = vld [vmem:[#allocation2 + $0x18] sm:$0xff]
      %v366 = vld [vmem:[#allocation2 + $0x20] sm:$0xff]
      %v367 = vld [vmem:[#allocation2 + $0x28] sm:$0xff]
      %v368 = vld [vmem:[#allocation2 + $0x30] sm:$0xff]
      %v369 = vld [vmem:[#allocation2 + $0x38] sm:$0xff]
      %v370 = vld [vmem:[#allocation2 + $0x40] sm:$0xff]
      %v371 = vld [vmem:[#allocation2 + $0x48] sm:$0xff]
      %v372 = vld [vmem:[#allocation2 + $0x50] sm:$0xff]
      %v373 = vld [vmem:[#allocation2 + $0x58] sm:$0xff]
      %v374 = vld [vmem:[#allocation2 + $0x60] sm:$0xff]
      %v375 = vld [vmem:[#allocation2 + $0x68] sm:$0xff]
      %v376 = vld [vmem:[#allocation2 + $0x70] sm:$0xff]
      %v377 = vld [vmem:[#allocation2 + $0x78] sm:$0xff]
      %v378 = vld [vmem:[%s1] sm:$0xff]
      %v379 = vld [vmem:[%s1 + $0x8] sm:$0xff]
      %v380 = vld [vmem:[%s1 + $0x10] sm:$0xff]
      %v381 = vld [vmem:[%s1 + $0x18] sm:$0xff]
      %v382 = vld [vmem:[%s1 + $0x20] sm:$0xff]
      %v383 = vld [vmem:[%s1 + $0x28] sm:$0xff]
      %v384 = vld [vmem:[%s1 + $0x30] sm:$0xff]
      %v385 = vld [vmem:[%s1 + $0x38] sm:$0xff]
      %v386 = vld [vmem:[%s1 + $0x40] sm:$0xff]
      %v387 = vld [vmem:[%s1 + $0x48] sm:$0xff]
      %v388 = vld [vmem:[%s1 + $0x50] sm:$0xff]
      %v389 = vld [vmem:[%s1 + $0x58] sm:$0xff]
      %v390 = vld [vmem:[%s1 + $0x60] sm:$0xff]
      %v391 = vld [vmem:[%s1 + $0x68] sm:$0xff]
      %v392 = vld [vmem:[%s1 + $0x70] sm:$0xff]
      %v393 = vld [vmem:[%s1 + $0x78] sm:$0xff]
      %395 = vset.pattern.permute.xlu0 0
      %396 = vperm.xlu0 %395, %v378
      %v397 = vpop.permute.xlu0 %396
      %400 = vset.pattern.permute.xlu0 0
      %401 = vperm.xlu0 %400, %v379
      %v402 = vpop.permute.xlu0 %401
      %405 = vset.pattern.permute.xlu0 0
      %406 = vperm.xlu0 %405, %v380
      %v407 = vpop.permute.xlu0 %406
      %410 = vset.pattern.permute.xlu0 0
      %411 = vperm.xlu0 %410, %v381
      %v412 = vpop.permute.xlu0 %411
      %415 = vset.pattern.permute.xlu0 0
      %416 = vperm.xlu0 %415, %v382
      %v417 = vpop.permute.xlu0 %416
      %420 = vset.pattern.permute.xlu0 0
      %421 = vperm.xlu0 %420, %v383
      %v422 = vpop.permute.xlu0 %421
      %425 = vset.pattern.permute.xlu0 0
      %426 = vperm.xlu0 %425, %v384
      %v427 = vpop.permute.xlu0 %426
      %430 = vset.pattern.permute.xlu0 0
      %431 = vperm.xlu0 %430, %v385
      %v432 = vpop.permute.xlu0 %431
      %435 = vset.pattern.permute.xlu0 0
      %436 = vperm.xlu0 %435, %v386
      %v437 = vpop.permute.xlu0 %436
      %440 = vset.pattern.permute.xlu0 0
      %441 = vperm.xlu0 %440, %v387
      %v442 = vpop.permute.xlu0 %441
      %445 = vset.pattern.permute.xlu0 0
      %446 = vperm.xlu0 %445, %v388
      %v447 = vpop.permute.xlu0 %446
      %450 = vset.pattern.permute.xlu0 0
      %451 = vperm.xlu0 %450, %v389
      %v452 = vpop.permute.xlu0 %451
      %455 = vset.pattern.permute.xlu0 0
      %456 = vperm.xlu0 %455, %v390
      %v457 = vpop.permute.xlu0 %456
      %460 = vset.pattern.permute.xlu0 0
      %461 = vperm.xlu0 %460, %v391
      %v462 = vpop.permute.xlu0 %461
      %465 = vset.pattern.permute.xlu0 0
      %466 = vperm.xlu0 %465, %v392
      %v467 = vpop.permute.xlu0 %466
      %470 = vset.pattern.permute.xlu0 0
      %471 = vperm.xlu0 %470, %v393
      %v472 = vpop.permute.xlu0 %471
      %v474 = vmul.f32 %v362, %v397
      %v475 = vmul.f32 %v363, %v402
      %v476 = vmul.f32 %v364, %v407
      %v477 = vmul.f32 %v365, %v412
      %v478 = vmul.f32 %v366, %v417
      %v479 = vmul.f32 %v367, %v422
      %v480 = vmul.f32 %v368, %v427
      %v481 = vmul.f32 %v369, %v432
      %v482 = vmul.f32 %v370, %v437
      %v483 = vmul.f32 %v371, %v442
      %v484 = vmul.f32 %v372, %v447
      %v485 = vmul.f32 %v373, %v452
      %v486 = vmul.f32 %v374, %v457
      %v487 = vmul.f32 %v375, %v462
      %v488 = vmul.f32 %v376, %v467
      %v489 = vmul.f32 %v377, %v472
      %v490 = vpack.c.bf16 %v475, %v474
      %v491 = vpack.c.bf16 %v477, %v476
      %v492 = vpack.c.bf16 %v479, %v478
      %v493 = vpack.c.bf16 %v481, %v480
      %v494 = vpack.c.bf16 %v483, %v482
      %v495 = vpack.c.bf16 %v485, %v484
      %v496 = vpack.c.bf16 %v487, %v486
      %v497 = vpack.c.bf16 %v489, %v488
      %v498 = vld [vmem:[#allocation8] sm:$0xf]
      %v499 = vld [vmem:[#allocation8 + $0x4] sm:$0xf]
      %v500 = vld [vmem:[#allocation8 + $0x8] sm:$0xf]
      %v501 = vld [vmem:[#allocation8 + $0xc] sm:$0xf]
      %v502 = vld [vmem:[#allocation8 + $0x10] sm:$0xf]
      %v503 = vld [vmem:[#allocation8 + $0x14] sm:$0xf]
      %v504 = vld [vmem:[#allocation8 + $0x18] sm:$0xf]
      %v505 = vld [vmem:[#allocation8 + $0x1c] sm:$0xf]
      %v506 = vld [vmem:[#allocation8 + $0x20] sm:$0xf]
      %v507 = vld [vmem:[#allocation8 + $0x24] sm:$0xf]
      %v508 = vld [vmem:[#allocation8 + $0x28] sm:$0xf]
      %v509 = vld [vmem:[#allocation8 + $0x2c] sm:$0xf]
      %v510 = vld [vmem:[#allocation8 + $0x30] sm:$0xf]
      %v511 = vld [vmem:[#allocation8 + $0x34] sm:$0xf]
      %v512 = vld [vmem:[#allocation8 + $0x38] sm:$0xf]
      %v513 = vld [vmem:[#allocation8 + $0x3c] sm:$0xf]
      %v530 = vunpack.c.l.b16 %v498
      %v531 = vunpack.c.l.b16 %v499
      %v532 = vunpack.c.l.b16 %v500
      %v533 = vunpack.c.l.b16 %v501
      %v534 = vunpack.c.l.b16 %v502
      %v535 = vunpack.c.l.b16 %v503
      %v536 = vunpack.c.l.b16 %v504
      %v537 = vunpack.c.l.b16 %v505
      %v538 = vunpack.c.l.b16 %v506
      %v539 = vunpack.c.l.b16 %v507
      %v540 = vunpack.c.l.b16 %v508
      %v541 = vunpack.c.l.b16 %v509
      %v542 = vunpack.c.l.b16 %v510
      %v543 = vunpack.c.l.b16 %v511
      %v544 = vunpack.c.l.b16 %v512
      %v545 = vunpack.c.l.b16 %v513
      %v546 = vpack.c.b16 %v531, %v530
      %v547 = vpack.c.b16 %v533, %v532
      %v548 = vpack.c.b16 %v535, %v534
      %v549 = vpack.c.b16 %v537, %v536
      %v550 = vpack.c.b16 %v539, %v538
      %v551 = vpack.c.b16 %v541, %v540
      %v552 = vpack.c.b16 %v543, %v542
      %v553 = vpack.c.b16 %v545, %v544
      %v562 = vld [vmem:[%s4] sm:$0xf]
      %v563 = vld [vmem:[%s4 + $0x4] sm:$0xf]
      %v564 = vld [vmem:[%s4 + $0x8] sm:$0xf]
      %v565 = vld [vmem:[%s4 + $0xc] sm:$0xf]
      %v566 = vld [vmem:[%s4 + $0x10] sm:$0xf]
      %v567 = vld [vmem:[%s4 + $0x14] sm:$0xf]
      %v568 = vld [vmem:[%s4 + $0x18] sm:$0xf]
      %v569 = vld [vmem:[%s4 + $0x1c] sm:$0xf]
      %v570 = vld [vmem:[%s4 + $0x20] sm:$0xf]
      %v571 = vld [vmem:[%s4 + $0x24] sm:$0xf]
      %v572 = vld [vmem:[%s4 + $0x28] sm:$0xf]
      %v573 = vld [vmem:[%s4 + $0x2c] sm:$0xf]
      %v574 = vld [vmem:[%s4 + $0x30] sm:$0xf]
      %v575 = vld [vmem:[%s4 + $0x34] sm:$0xf]
      %v576 = vld [vmem:[%s4 + $0x38] sm:$0xf]
      %v577 = vld [vmem:[%s4 + $0x3c] sm:$0xf]
      %v578 = vld [vmem:[%s4 + $0x40] sm:$0xf]
      %v579 = vld [vmem:[%s4 + $0x44] sm:$0xf]
      %v580 = vld [vmem:[%s4 + $0x48] sm:$0xf]
      %v581 = vld [vmem:[%s4 + $0x4c] sm:$0xf]
      %v582 = vld [vmem:[%s4 + $0x50] sm:$0xf]
      %v583 = vld [vmem:[%s4 + $0x54] sm:$0xf]
      %v584 = vld [vmem:[%s4 + $0x58] sm:$0xf]
      %v585 = vld [vmem:[%s4 + $0x5c] sm:$0xf]
      %v586 = vld [vmem:[%s4 + $0x60] sm:$0xf]
      %v587 = vld [vmem:[%s4 + $0x64] sm:$0xf]
      %v588 = vld [vmem:[%s4 + $0x68] sm:$0xf]
      %v589 = vld [vmem:[%s4 + $0x6c] sm:$0xf]
      %v590 = vld [vmem:[%s4 + $0x70] sm:$0xf]
      %v591 = vld [vmem:[%s4 + $0x74] sm:$0xf]
      %v592 = vld [vmem:[%s4 + $0x78] sm:$0xf]
      %v593 = vld [vmem:[%s4 + $0x7c] sm:$0xf]
      %v594 = vld [vmem:[%s5] sm:$0x1]
      %v596 = vlaneseq
      %v597 = vshrl.u32 %v596, 7
      %v598 = vsub.s32 0, %v597
      %v599 = vrot.slane %v594, %v598
      %v633 = vunpack.c.l.b16 %v562
      %v634 = vunpack.c.l.b16 %v563
      %v635 = vunpack.c.l.b16 %v564
      %v636 = vunpack.c.l.b16 %v565
      %v637 = vunpack.c.l.b16 %v566
      %v638 = vunpack.c.l.b16 %v567
      %v639 = vunpack.c.l.b16 %v568
      %v640 = vunpack.c.l.b16 %v569
      %v641 = vunpack.c.l.b16 %v570
      %v642 = vunpack.c.l.b16 %v571
      %v643 = vunpack.c.l.b16 %v572
      %v644 = vunpack.c.l.b16 %v573
      %v645 = vunpack.c.l.b16 %v574
      %v646 = vunpack.c.l.b16 %v575
      %v647 = vunpack.c.l.b16 %v576
      %v648 = vunpack.c.l.b16 %v577
      %v649 = vunpack.c.l.b16 %v578
      %v650 = vunpack.c.l.b16 %v579
      %v651 = vunpack.c.l.b16 %v580
      %v652 = vunpack.c.l.b16 %v581
      %v653 = vunpack.c.l.b16 %v582
      %v654 = vunpack.c.l.b16 %v583
      %v655 = vunpack.c.l.b16 %v584
      %v656 = vunpack.c.l.b16 %v585
      %v657 = vunpack.c.l.b16 %v586
      %v658 = vunpack.c.l.b16 %v587
      %v659 = vunpack.c.l.b16 %v588
      %v660 = vunpack.c.l.b16 %v589
      %v661 = vunpack.c.l.b16 %v590
      %v662 = vunpack.c.l.b16 %v591
      %v663 = vunpack.c.l.b16 %v592
      %v664 = vunpack.c.l.b16 %v593
      %v665 = vpack.c.b16 %v634, %v633
      %v666 = vpack.c.b16 %v636, %v635
      %v667 = vpack.c.b16 %v638, %v637
      %v668 = vpack.c.b16 %v640, %v639
      %v669 = vpack.c.b16 %v642, %v641
      %v670 = vpack.c.b16 %v644, %v643
      %v671 = vpack.c.b16 %v646, %v645
      %v672 = vpack.c.b16 %v648, %v647
      %v673 = vpack.c.b16 %v650, %v649
      %v674 = vpack.c.b16 %v652, %v651
      %v675 = vpack.c.b16 %v654, %v653
      %v676 = vpack.c.b16 %v656, %v655
      %v677 = vpack.c.b16 %v658, %v657
      %v678 = vpack.c.b16 %v660, %v659
      %v679 = vpack.c.b16 %v662, %v661
      %v680 = vpack.c.b16 %v664, %v663
      %697 = vmatprep.subr.bf16.mxu0 0
      %698 = vmatpush1.bf16.msra.mxu0 %v665
      %699 = vmatprep.subr.bf16.mxu0 0
      %700 = vmatpush1.bf16.msra.mxu0 %v666
      %701 = vmatprep.subr.bf16.mxu0 0
      %702 = vmatpush1.bf16.msra.mxu0 %v667
      %703 = vmatprep.subr.bf16.mxu0 0
      %704 = vmatpush1.bf16.msra.mxu0 %v668
      %705 = vmatprep.subr.bf16.mxu0 0
      %706 = vmatpush1.bf16.msra.mxu0 %v669
      %707 = vmatprep.subr.bf16.mxu0 0
      %708 = vmatpush1.bf16.msra.mxu0 %v670
      %709 = vmatprep.subr.bf16.mxu0 0
      %710 = vmatpush1.bf16.msra.mxu0 %v671
      %711 = vmatprep.subr.bf16.mxu0 0
      %712 = vmatpush1.bf16.msra.mxu0 %v672
      %713 = vmatprep.subr.bf16.mxu0 0
      %714 = vmatpush1.bf16.msra.mxu0 %v673
      %715 = vmatprep.subr.bf16.mxu0 0
      %716 = vmatpush1.bf16.msra.mxu0 %v674
      %717 = vmatprep.subr.bf16.mxu0 0
      %718 = vmatpush1.bf16.msra.mxu0 %v675
      %719 = vmatprep.subr.bf16.mxu0 0
      %720 = vmatpush1.bf16.msra.mxu0 %v676
      %721 = vmatprep.subr.bf16.mxu0 0
      %722 = vmatpush1.bf16.msra.mxu0 %v677
      %723 = vmatprep.subr.bf16.mxu0 0
      %724 = vmatpush1.bf16.msra.mxu0 %v678
      %725 = vmatprep.subr.bf16.mxu0 0
      %726 = vmatpush1.bf16.msra.mxu0 %v679
      %727 = vmatprep.subr.bf16.mxu0 0
      %728 = vmatpush1.bf16.msra.mxu0 %v680
      %729 = vmatprep.mubr.bf16.mxu0 %v546
      %730 = vmatmul.mubr.bf16.gmra.mrb[0].mxu0 %v490
      %v731 = vpop.f32.mrb[0].mxu0
      %v732 = vadd.f32 %v599, %v731
      %v733 = vpop.f32.mrb[0].mxu0
      %v734 = vpop.f32.mrb[0].mxu0
      %v735 = vadd.f32 %v599, %v734
      %v736 = vpop.f32.mrb[0].mxu0
      %737 = vmatprep.mubr.bf16.mxu0 %v547
      %738 = vmatmul.mubr.bf16.gmra.mrb[0].mxu0 %v491
      %v739 = vpop.f32.mrb[0].mxu0
      %v740 = vadd.f32 %v599, %v739
      %v741 = vpop.f32.mrb[0].mxu0
      %v742 = vpop.f32.mrb[0].mxu0
      %v743 = vadd.f32 %v599, %v742
      %v744 = vpop.f32.mrb[0].mxu0
      %745 = vmatprep.mubr.bf16.mxu0 %v548
      %746 = vmatmul.mubr.bf16.gmra.mrb[0].mxu0 %v492
      %v747 = vpop.f32.mrb[0].mxu0
      %v748 = vadd.f32 %v599, %v747
      %v749 = vpop.f32.mrb[0].mxu0
      %v750 = vpop.f32.mrb[0].mxu0
      %v751 = vadd.f32 %v599, %v750
      %v752 = vpop.f32.mrb[0].mxu0
      %753 = vmatprep.mubr.bf16.mxu0 %v549
      %754 = vmatmul.mubr.bf16.gmra.mrb[0].mxu0 %v493
      %v755 = vpop.f32.mrb[0].mxu0
      %v756 = vadd.f32 %v599, %v755
      %v757 = vpop.f32.mrb[0].mxu0
      %v758 = vpop.f32.mrb[0].mxu0
      %v759 = vadd.f32 %v599, %v758
      %v760 = vpop.f32.mrb[0].mxu0
      %761 = vmatprep.mubr.bf16.mxu0 %v550
      %762 = vmatmul.mubr.bf16.gmra.mrb[0].mxu0 %v494
      %v763 = vpop.f32.mrb[0].mxu0
      %v764 = vadd.f32 %v599, %v763
      %v765 = vpop.f32.mrb[0].mxu0
      %v766 = vpop.f32.mrb[0].mxu0
      %v767 = vadd.f32 %v599, %v766
      %v768 = vpop.f32.mrb[0].mxu0
      %769 = vmatprep.mubr.bf16.mxu0 %v551
      %770 = vmatmul.mubr.bf16.gmra.mrb[0].mxu0 %v495
      %v771 = vpop.f32.mrb[0].mxu0
      %v772 = vadd.f32 %v599, %v771
      %v773 = vpop.f32.mrb[0].mxu0
      %v774 = vpop.f32.mrb[0].mxu0
      %v775 = vadd.f32 %v599, %v774
      %v776 = vpop.f32.mrb[0].mxu0
      %777 = vmatprep.mubr.bf16.mxu0 %v552
      %778 = vmatmul.mubr.bf16.gmra.mrb[0].mxu0 %v496
      %v779 = vpop.f32.mrb[0].mxu0
      %v780 = vadd.f32 %v599, %v779
      %v781 = vpop.f32.mrb[0].mxu0
      %v782 = vpop.f32.mrb[0].mxu0
      %v783 = vadd.f32 %v599, %v782
      %v784 = vpop.f32.mrb[0].mxu0
      %785 = vmatprep.mubr.bf16.mxu0 %v553
      %786 = vmatmul.mubr.bf16.gmra.mrb[0].mxu0 %v497
      %v787 = vpop.f32.mrb[0].mxu0
      %v788 = vadd.f32 %v599, %v787
      %v789 = vpop.f32.mrb[0].mxu0
      %v790 = vpop.f32.mrb[0].mxu0
      %v791 = vadd.f32 %v599, %v790
      %v792 = vpop.f32.mrb[0].mxu0
      %793 = vdwg.mxu0
      %vm794 = vcmp.gt.f32.partialorder %v732, 0.0
      %vm795 = vcmp.gt.f32.partialorder %v735, 0.0
      %vm796 = vcmp.gt.f32.partialorder %v740, 0.0
      %vm797 = vcmp.gt.f32.partialorder %v743, 0.0
      %vm798 = vcmp.gt.f32.partialorder %v748, 0.0
      %vm799 = vcmp.gt.f32.partialorder %v751, 0.0
      %vm800 = vcmp.gt.f32.partialorder %v756, 0.0
      %vm801 = vcmp.gt.f32.partialorder %v759, 0.0
      %vm802 = vcmp.gt.f32.partialorder %v764, 0.0
      %vm803 = vcmp.gt.f32.partialorder %v767, 0.0
      %vm804 = vcmp.gt.f32.partialorder %v772, 0.0
      %vm805 = vcmp.gt.f32.partialorder %v775, 0.0
      %vm806 = vcmp.gt.f32.partialorder %v780, 0.0
      %vm807 = vcmp.gt.f32.partialorder %v783, 0.0
      %vm808 = vcmp.gt.f32.partialorder %v788, 0.0
      %vm809 = vcmp.gt.f32.partialorder %v791, 0.0
      %v810 = vmul.f32 %v732, 0.25
      %v811 = vmul.f32 %v735, 0.25
      %v812 = vmul.f32 %v740, 0.25
      %v813 = vmul.f32 %v743, 0.25
      %v814 = vmul.f32 %v748, 0.25
      %v815 = vmul.f32 %v751, 0.25
      %v816 = vmul.f32 %v756, 0.25
      %v817 = vmul.f32 %v759, 0.25
      %v818 = vmul.f32 %v764, 0.25
      %v819 = vmul.f32 %v767, 0.25
      %v820 = vmul.f32 %v772, 0.25
      %v821 = vmul.f32 %v775, 0.25
      %v822 = vmul.f32 %v780, 0.25
      %v823 = vmul.f32 %v783, 0.25
      %v824 = vmul.f32 %v788, 0.25
      %v825 = vmul.f32 %v791, 0.25
      %v826 = vsel %vm794, %v732, %v810
      %v827 = vsel %vm795, %v735, %v811
      %v828 = vsel %vm796, %v740, %v812
      %v829 = vsel %vm797, %v743, %v813
      %v830 = vsel %vm798, %v748, %v814
      %v831 = vsel %vm799, %v751, %v815
      %v832 = vsel %vm800, %v756, %v816
      %v833 = vsel %vm801, %v759, %v817
      %v834 = vsel %vm802, %v764, %v818
      %v835 = vsel %vm803, %v767, %v819
      %v836 = vsel %vm804, %v772, %v820
      %v837 = vsel %vm805, %v775, %v821
      %v838 = vsel %vm806, %v780, %v822
      %v839 = vsel %vm807, %v783, %v823
      %v840 = vsel %vm808, %v788, %v824
      %v841 = vsel %vm809, %v791, %v825
      %v842 = vpack.c.bf16 %v827, %v826
      %v843 = vpack.c.bf16 %v829, %v828
      %v844 = vpack.c.bf16 %v831, %v830
      %v845 = vpack.c.bf16 %v833, %v832
      %v846 = vpack.c.bf16 %v835, %v834
      %v847 = vpack.c.bf16 %v837, %v836
      %v848 = vpack.c.bf16 %v839, %v838
      %v849 = vpack.c.bf16 %v841, %v840
      %v858 = vunpack.c.l.b16 %v842
      %v859 = vunpack.c.h.b16 %v842
      %v860 = vunpack.c.l.b16 %v843
      %v861 = vunpack.c.h.b16 %v843
      %v862 = vunpack.c.l.b16 %v844
      %v863 = vunpack.c.h.b16 %v844
      %v864 = vunpack.c.l.b16 %v845
      %v865 = vunpack.c.h.b16 %v845
      %v866 = vunpack.c.l.b16 %v846
      %v867 = vunpack.c.h.b16 %v846
      %v868 = vunpack.c.l.b16 %v847
      %v869 = vunpack.c.h.b16 %v847
      %v870 = vunpack.c.l.b16 %v848
      %v871 = vunpack.c.h.b16 %v848
      %v872 = vunpack.c.l.b16 %v849
      %v873 = vunpack.c.h.b16 %v849
      %v874 = vpack.c.b16 %v858, %v858
      %v875 = vpack.c.b16 %v859, %v859
      %v876 = vpack.c.b16 %v860, %v860
      %v877 = vpack.c.b16 %v861, %v861
      %v878 = vpack.c.b16 %v862, %v862
      %v879 = vpack.c.b16 %v863, %v863
      %v880 = vpack.c.b16 %v864, %v864
      %v881 = vpack.c.b16 %v865, %v865
      %v882 = vpack.c.b16 %v866, %v866
      %v883 = vpack.c.b16 %v867, %v867
      %v884 = vpack.c.b16 %v868, %v868
      %v885 = vpack.c.b16 %v869, %v869
      %v886 = vpack.c.b16 %v870, %v870
      %v887 = vpack.c.b16 %v871, %v871
      %v888 = vpack.c.b16 %v872, %v872
      %v889 = vpack.c.b16 %v873, %v873
      %906 = vst [vmem:[#allocation9] sm:$0xf] %v874
      %907 = vst [vmem:[#allocation9 + $0x4] sm:$0xf] %v875
      %908 = vst [vmem:[#allocation9 + $0x8] sm:$0xf] %v876
      %909 = vst [vmem:[#allocation9 + $0xc] sm:$0xf] %v877
      %910 = vst [vmem:[#allocation9 + $0x10] sm:$0xf] %v878
      %911 = vst [vmem:[#allocation9 + $0x14] sm:$0xf] %v879
      %912 = vst [vmem:[#allocation9 + $0x18] sm:$0xf] %v880
      %913 = vst [vmem:[#allocation9 + $0x1c] sm:$0xf] %v881
      %914 = vst [vmem:[#allocation9 + $0x20] sm:$0xf] %v882
      %915 = vst [vmem:[#allocation9 + $0x24] sm:$0xf] %v883
      %916 = vst [vmem:[#allocation9 + $0x28] sm:$0xf] %v884
      %917 = vst [vmem:[#allocation9 + $0x2c] sm:$0xf] %v885
      %918 = vst [vmem:[#allocation9 + $0x30] sm:$0xf] %v886
      %919 = vst [vmem:[#allocation9 + $0x34] sm:$0xf] %v887
      %920 = vst [vmem:[#allocation9 + $0x38] sm:$0xf] %v888
      %921 = vst [vmem:[#allocation9 + $0x3c] sm:$0xf] %v889
    $region45: #{tpu_custom_call.1} parent=1 // pred_fallthru
      _
    // Predicated region
    $region46: #{tpu_custom_call.1} parent=1 // pred_check
      _
    $region47: #{tpu_custom_call.1} parent=1 // pred_check_branch
      %923 = sbr.rel (0) target = $region49
    $region48: #{tpu_custom_call.1} parent=1 // pred_region
      %s925 = ssub.s32 1024, 1024
      %926 = vsyncadd [#allocation5], %s925
      %s927 = sshll.u32 [#allocation9], 4
      %s928 = int_to_ptr.vmem [resolvable:$true] %s927
      %933 = dma.vmem_to_hbm [thread:$0]  %s928, 1024, %s6, [#allocation5], 64, 64, 4
    $region49: #{tpu_custom_call.1} parent=1 // pred_fallthru
      _
    // Predicated region
    $region50: #{tpu_custom_call.1} parent=1 // pred_check
      _
    $region51: #{tpu_custom_call.1} parent=1 // pred_check_branch
      %935 = sbr.rel (0) target = $region53
    $region52: #{tpu_custom_call.1} parent=1 // pred_region
      %936 = dma.done [#allocation5], 1024
    $region53: #{tpu_custom_call.1} parent=1 // pred_fallthru
      _
    %937 = vsyncpa [#allocation4], 1
    %938 = vsyncpa [#allocation7], 1
    %939 = vsyncpa [#allocation5], 1

</llo_original>
